<compile_context>
chip_gen: v7x
topology: tpu7x:2x2x1
jax: 0.10.0
libtpu: 0.0.40
codegen_flags: <defaults>
</compile_context>

<pallas_src>
import jax
import jax.numpy as jnp
from jax.experimental import pallas as pl
from jax.experimental.pallas import tpu as pltpu

_EPS = 1e-5  # nn.BatchNorm2d default eps


def _pick_hw_tile(hw, c_in, c_out, vmem_budget_bytes=8 << 20):
    """Largest spatial tile T such that T divides HW, T is a multiple of 128
    (or equals HW), and the double-buffered f32 tiles stay well inside the
    scoped VMEM limit (conservative enough for v7x's smaller VMEM)."""
    bytes_per_col = 8 * (c_in + c_out)          # 2x double-buffered f32 in + out columns
    max_t = max(128, vmem_budget_bytes // max(bytes_per_col, 1))
    if hw <= max_t:
        return hw
    t = (max_t // 128) * 128
    while t >= 128:
        if hw % t == 0:
            return t
        t -= 128
    return hw  # fallback: single (possibly large) tile


def _make_conv_stats_kernel(num_inputs):
    """Pass 1: y = sum_i W_i @ x_i ; accumulate per-channel sum / sumsq."""

    def kernel(*refs):
        x_refs = refs[:num_inputs]                          # each (C_i, T)
        w_refs = refs[num_inputs:2 * num_inputs]            # each (Cout, C_i), resident
        y_ref, sum_ref, sumsq_ref = refs[2 * num_inputs:2 * num_inputs + 3]

        # 1x1 conv over the concatenated channel axis == in-kernel K-accumulation.
        y = jnp.dot(w_refs[0][...], x_refs[0][...],
                    preferred_element_type=jnp.float32)
        for i in range(1, num_inputs):
            y = y + jnp.dot(w_refs[i][...], x_refs[i][...],
                            preferred_element_type=jnp.float32)

        y_ref[...] = y                                       # (Cout, T), lane-dense

        # Cross-tile BN statistics: resident accumulators (constant index_map).
        @pl.when((pl.program_id(0) == 0) & (pl.program_id(1) == 0))
        def _():
            sum_ref[...] = jnp.zeros_like(sum_ref)
            sumsq_ref[...] = jnp.zeros_like(sumsq_ref)

        sum_ref[...] += jnp.sum(y, axis=1, keepdims=True)
        sumsq_ref[...] += jnp.sum(y * y, axis=1, keepdims=True)

    return kernel


def _bn_relu_kernel(y_ref, scale_ref, bias_ref, o_ref):
    """Pass 2: out = max(y * scale + bias, 0)   (scale/bias: (Cout,1) resident)."""
    o_ref[...] = jnp.maximum(y_ref[...] * scale_ref[...] + bias_ref[...], 0.0)


def root_forward(xs, conv_weight, bn_gamma, bn_beta):
    """Pallas implementation of Root.forward.

    xs          : list of NCHW float32 arrays (same N, H, W).
    conv_weight : (Cout, Cin, 1, 1) float32  (nn.Conv2d weight, bias=False).
    bn_gamma    : (Cout,) float32            (BatchNorm2d weight).
    bn_beta     : (Cout,) float32            (BatchNorm2d bias).
    Returns     : (N, Cout, H, W) float32.
    """
    n_b, _, h, w_sp = xs[0].shape
    hw = h * w_sp
    c_list = [int(x.shape[1]) for x in xs]
    c_in = sum(c_list)
    c_out, c_in_w, kh, kw = conv_weight.shape
    assert c_in_w == c_in and kh == 1 and kw == 1, "only 1x1 conv (default kernel_size=1)"

    num_inputs = len(xs)
    t_hw = _pick_hw_tile(hw, c_in, c_out)
    num_t = hw // t_hw
    m_total = n_b * hw

    # Free reshapes (layout-preserving): NCHW -> (N, C, H*W).
    x3d = [x.astype(jnp.float32).reshape(n_b, c, hw) for x, c in zip(xs, c_list)]

    # Split the conv weight along Cin into per-input slices (tiny).
    w2d = conv_weight.astype(jnp.float32).reshape(c_out, c_in)
    offs = [0]
    for c in c_list:
        offs.append(offs[-1] + c)
    w_list = [w2d[:, offs[i]:offs[i + 1]] for i in range(num_inputs)]

    # ---- BlockSpecs ----
    x_specs = [
        pl.BlockSpec((pl.Squeezed(), c, t_hw), lambda b, j: (b, 0, j))
        for c in c_list
    ]
    w_specs = [
        pl.BlockSpec((c_out, c), lambda b, j: (0, 0))        # resident, loaded once
        for c in c_list
    ]
    y_spec = pl.BlockSpec((pl.Squeezed(), c_out, t_hw), lambda b, j: (b, 0, j))
    stat_spec = pl.BlockSpec((c_out, 1), lambda b, j: (0, 0))  # resident accumulator

    # ---- Pass 1: conv (matmul) + per-channel sum / sumsq ----
    ce1 = pl.CostEstimate(
        flops=2 * m_total * c_in * c_out + 4 * m_total * c_out,
        transcendentals=0,
        bytes_accessed=4 * (m_total * c_in + m_total * c_out + 2 * c_out + c_in * c_out),
    )
    y3d, ch_sum, ch_sumsq = pl.pallas_call(
        _make_conv_stats_kernel(num_inputs),
        out_shape=(
            jax.ShapeDtypeStruct((n_b, c_out, hw), jnp.float32),
            jax.ShapeDtypeStruct((c_out, 1), jnp.float32),
            jax.ShapeDtypeStruct((c_out, 1), jnp.float32),
        ),
        grid_spec=pltpu.PrefetchScalarGridSpec(
            num_scalar_prefetch=0,
            grid=(n_b, num_t),
            in_specs=x_specs + w_specs,
            out_specs=(y_spec, stat_spec, stat_spec),
        ),
        compiler_params=pltpu.CompilerParams(
            dimension_semantics=("arbitrary", "arbitrary")),
        cost_estimate=ce1,
    )(*x3d, *w_list)

    # ---- Tiny glue: finalize BN statistics into per-channel scale / bias ----
    mean = ch_sum[:, 0] / m_total
    var = jnp.maximum(ch_sumsq[:, 0] / m_total - mean * mean, 0.0)  # biased variance
    inv_std = jax.lax.rsqrt(var + _EPS)
    scale_v = bn_gamma.astype(jnp.float32) * inv_std
    bias_v = bn_beta.astype(jnp.float32) - mean * scale_v
    scale2d = scale_v.reshape(c_out, 1)
    bias2d = bias_v.reshape(c_out, 1)

    # ---- Pass 2: normalize + ReLU (embarrassingly parallel over N, HW) ----
    ce2 = pl.CostEstimate(
        flops=3 * m_total * c_out,
        transcendentals=0,
        bytes_accessed=4 * (2 * m_total * c_out + 2 * c_out),
    )
    out3d = pl.pallas_call(
        _bn_relu_kernel,
        out_shape=jax.ShapeDtypeStruct((n_b, c_out, hw), jnp.float32),
        grid_spec=pltpu.PrefetchScalarGridSpec(
            num_scalar_prefetch=0,
            grid=(n_b, num_t),
            in_specs=[y_spec, stat_spec, stat_spec],
            out_specs=y_spec,
        ),
        compiler_params=pltpu.CompilerParams(
            dimension_semantics=("parallel", "parallel")),
        cost_estimate=ce2,
    )(y3d, scale2d, bias2d)

    return out3d.reshape(n_b, c_out, h, w_sp)


def _reference(xs, conv_weight, bn_gamma, bn_beta):
    """Pure-JAX reference for correctness checking."""
    x = jnp.concatenate(xs, axis=1)
    w = conv_weight.reshape(conv_weight.shape[0], conv_weight.shape[1])
    y = jnp.einsum("nchw,oc->nohw", x, w)
    mean = jnp.mean(y, axis=(0, 2, 3), keepdims=True)
    var = jnp.mean((y - mean) ** 2, axis=(0, 2, 3), keepdims=True)
    g = bn_gamma.reshape(1, -1, 1, 1)
    b = bn_beta.reshape(1, -1, 1, 1)
    return jnp.maximum((y - mean) / jnp.sqrt(var + _EPS) * g + b, 0.0)


if __name__ == "__main__":
    key = jax.random.PRNGKey(0)
    k1, k2, k3, k4, k5 = jax.random.split(key, 5)

    # Small shapes: two inputs of (N=2, C=4, H=16, W=16) -> concat C_in = 8.
    n, h, w = 2, 16, 16
    c_each, c_out = 4, 16
    in_channels = 2 * c_each

    x0 = jax.random.normal(k1, (n, c_each, h, w), dtype=jnp.float32)
    x1 = jax.random.normal(k2, (n, c_each, h, w), dtype=jnp.float32)

    # Deterministic synthetic parameters (shapes from Root.__init__).
    conv_weight = jax.random.normal(k3, (c_out, in_channels, 1, 1), dtype=jnp.float32) * 0.1
    bn_gamma = 1.0 + 0.1 * jax.random.normal(k4, (c_out,), dtype=jnp.float32)
    bn_beta = 0.1 * jax.random.normal(k5, (c_out,), dtype=jnp.float32)

    out = root_forward([x0, x1], conv_weight, bn_gamma, bn_beta)
    out = jax.block_until_ready(out)

    ref = _reference([x0, x1], conv_weight, bn_gamma, bn_beta)
    assert out.shape == (n, c_out, h, w)
    assert jnp.allclose(out, ref, atol=1e-4, rtol=1e-4), "mismatch vs reference"

    print("KERNEL_OK")
</pallas_src>

<mosaic_0001>
module attributes {stable_mosaic.version = 11 : i64} {
  func.func @kernel(%arg0: i32, %arg1: i32, %arg2: memref<1x4x256xf32, #tpu.memory_space<vmem>>, %arg3: memref<1x4x256xf32, #tpu.memory_space<vmem>>, %arg4: memref<16x4xf32, #tpu.memory_space<vmem>>, %arg5: memref<16x4xf32, #tpu.memory_space<vmem>>, %arg6: memref<1x16x256xf32, #tpu.memory_space<vmem>>, %arg7: memref<16x1xf32, #tpu.memory_space<vmem>>, %arg8: memref<16x1xf32, #tpu.memory_space<vmem>>) attributes {dimension_semantics = [#tpu.dimension_semantics<arbitrary>, #tpu.dimension_semantics<arbitrary>], iteration_bounds = array<i64: 2, 1>, scalar_prefetch = 0 : i64, scratch_operands = 0 : i64, tpu.core_type = #tpu.core_type<tc>, window_params = [{transform_indices = @transform_0, window_bounds = array<i64: 1, 4, 256>}, {transform_indices = @transform_1, window_bounds = array<i64: 1, 4, 256>}, {pipeline_mode = #tpu.pipeline_mode<synchronous>, transform_indices = @transform_2, window_bounds = array<i64: 16, 4>}, {pipeline_mode = #tpu.pipeline_mode<synchronous>, transform_indices = @transform_3, window_bounds = array<i64: 16, 4>}, {transform_indices = @transform_4, window_bounds = array<i64: 1, 16, 256>}, {pipeline_mode = #tpu.pipeline_mode<synchronous>, transform_indices = @transform_5, window_bounds = array<i64: 16, 1>}, {pipeline_mode = #tpu.pipeline_mode<synchronous>, transform_indices = @transform_6, window_bounds = array<i64: 16, 1>}]} {
    %c0 = arith.constant 0 : index
    %c0_0 = arith.constant 0 : index
    %0 = vector.load %arg4[%c0, %c0_0] : memref<16x4xf32, #tpu.memory_space<vmem>>, vector<16x4xf32>
    %c0_1 = arith.constant 0 : index
    %c0_2 = arith.constant 0 : index
    %c0_3 = arith.constant 0 : index
    %1 = vector.load %arg2[%c0_1, %c0_2, %c0_3] : memref<1x4x256xf32, #tpu.memory_space<vmem>>, vector<1x4x256xf32>
    %2 = vector.shape_cast %1 : vector<1x4x256xf32> to vector<4x256xf32>
    %cst = arith.constant dense<0.000000e+00> : vector<16x256xf32>
    %3 = tpu.matmul %0, %2, %cst {dimension_numbers = #tpu.dot_dimension_numbers<[1], [0], [0], [1], [0, 0, 1, 1], [], []>} : vector<16x4xf32>, vector<4x256xf32>, vector<16x256xf32> -> vector<16x256xf32>
    %c0_4 = arith.constant 0 : index
    %c0_5 = arith.constant 0 : index
    %4 = vector.load %arg5[%c0_4, %c0_5] : memref<16x4xf32, #tpu.memory_space<vmem>>, vector<16x4xf32>
    %c0_6 = arith.constant 0 : index
    %c0_7 = arith.constant 0 : index
    %c0_8 = arith.constant 0 : index
    %5 = vector.load %arg3[%c0_6, %c0_7, %c0_8] : memref<1x4x256xf32, #tpu.memory_space<vmem>>, vector<1x4x256xf32>
    %6 = vector.shape_cast %5 : vector<1x4x256xf32> to vector<4x256xf32>
    %cst_9 = arith.constant dense<0.000000e+00> : vector<16x256xf32>
    %7 = tpu.matmul %4, %6, %cst_9 {dimension_numbers = #tpu.dot_dimension_numbers<[1], [0], [0], [1], [0, 0, 1, 1], [], []>} : vector<16x4xf32>, vector<4x256xf32>, vector<16x256xf32> -> vector<16x256xf32>
    %8 = arith.addf %3, %7 : vector<16x256xf32>
    %c0_10 = arith.constant 0 : index
    %c0_11 = arith.constant 0 : index
    %c0_12 = arith.constant 0 : index
    %9 = vector.load %arg6[%c0_10, %c0_11, %c0_12] : memref<1x16x256xf32, #tpu.memory_space<vmem>>, vector<1x16x256xf32>
    %10 = vector.shape_cast %9 : vector<1x16x256xf32> to vector<16x256xf32>
    %11 = vector.shape_cast %8 : vector<16x256xf32> to vector<1x16x256xf32>
    tpu.vector_store %arg6[%c0_10, %c0_11, %c0_12], %11 {strides = array<i32>} : memref<1x16x256xf32, #tpu.memory_space<vmem>>, vector<1x16x256xf32>,
    %c0_i32 = arith.constant 0 : i32
    %12 = arith.cmpi eq, %arg0, %c0_i32 : i32
    %c0_i32_13 = arith.constant 0 : i32
    %13 = arith.cmpi eq, %arg1, %c0_i32_13 : i32
    %14 = arith.andi %12, %13 : i1
    %15 = arith.extui %14 : i1 to i32
    %c0_i32_14 = arith.constant 0 : i32
    %16 = arith.cmpi ne, %15, %c0_i32_14 : i32
    scf.if %16 {
      %cst_25 = arith.constant 0.000000e+00 : f32
      %28 = vector.broadcast %cst_25 : f32 to vector<16x1xf32>
      %c0_26 = arith.constant 0 : index
      %c0_27 = arith.constant 0 : index
      %29 = vector.load %arg7[%c0_26, %c0_27] : memref<16x1xf32, #tpu.memory_space<vmem>>, vector<16x1xf32>
      tpu.vector_store %arg7[%c0_26, %c0_27], %28 {strides = array<i32>} : memref<16x1xf32, #tpu.memory_space<vmem>>, vector<16x1xf32>,
      %cst_28 = arith.constant 0.000000e+00 : f32
      %30 = vector.broadcast %cst_28 : f32 to vector<16x1xf32>
      %c0_29 = arith.constant 0 : index
      %c0_30 = arith.constant 0 : index
      %31 = vector.load %arg8[%c0_29, %c0_30] : memref<16x1xf32, #tpu.memory_space<vmem>>, vector<16x1xf32>
      tpu.vector_store %arg8[%c0_29, %c0_30], %30 {strides = array<i32>} : memref<16x1xf32, #tpu.memory_space<vmem>>, vector<16x1xf32>,
    } else {
    }
    %c0_15 = arith.constant 0 : index
    %c0_16 = arith.constant 0 : index
    %17 = vector.load %arg7[%c0_15, %c0_16] : memref<16x1xf32, #tpu.memory_space<vmem>>, vector<16x1xf32>
    %cst_17 = arith.constant dense<0.000000e+00> : vector<16xf32>
    %18 = vector.multi_reduction <add>, %8, %cst_17 [1] : vector<16x256xf32> to vector<16xf32>
    %19 = vector.shape_cast %18 : vector<16xf32> to vector<16x1xf32>
    %20 = arith.addf %17, %19 : vector<16x1xf32>
    %c0_18 = arith.constant 0 : index
    %c0_19 = arith.constant 0 : index
    %21 = vector.load %arg7[%c0_18, %c0_19] : memref<16x1xf32, #tpu.memory_space<vmem>>, vector<16x1xf32>
    tpu.vector_store %arg7[%c0_18, %c0_19], %20 {strides = array<i32>} : memref<16x1xf32, #tpu.memory_space<vmem>>, vector<16x1xf32>,
    %c0_20 = arith.constant 0 : index
    %c0_21 = arith.constant 0 : index
    %22 = vector.load %arg8[%c0_20, %c0_21] : memref<16x1xf32, #tpu.memory_space<vmem>>, vector<16x1xf32>
    %23 = arith.mulf %8, %8 : vector<16x256xf32>
    %cst_22 = arith.constant dense<0.000000e+00> : vector<16xf32>
    %24 = vector.multi_reduction <add>, %23, %cst_22 [1] : vector<16x256xf32> to vector<16xf32>
    %25 = vector.shape_cast %24 : vector<16xf32> to vector<16x1xf32>
    %26 = arith.addf %22, %25 : vector<16x1xf32>
    %c0_23 = arith.constant 0 : index
    %c0_24 = arith.constant 0 : index
    %27 = vector.load %arg8[%c0_23, %c0_24] : memref<16x1xf32, #tpu.memory_space<vmem>>, vector<16x1xf32>
    tpu.vector_store %arg8[%c0_23, %c0_24], %26 {strides = array<i32>} : memref<16x1xf32, #tpu.memory_space<vmem>>, vector<16x1xf32>,
    return
  }
  func.func @transform_0(%arg0: i32, %arg1: i32) -> (i32, i32, i32) {
    %c0_i32 = arith.constant 0 : i32
    %c0_i32_0 = arith.constant 0 : i32
    return %arg0, %c0_i32, %arg1 : i32, i32, i32
  }
  func.func @transform_1(%arg0: i32, %arg1: i32) -> (i32, i32, i32) {
    %c0_i32 = arith.constant 0 : i32
    %c0_i32_0 = arith.constant 0 : i32
    return %arg0, %c0_i32, %arg1 : i32, i32, i32
  }
  func.func @transform_2(%arg0: i32, %arg1: i32) -> (i32, i32) {
    %c0_i32 = arith.constant 0 : i32
    %c0_i32_0 = arith.constant 0 : i32
    %c0_i32_1 = arith.constant 0 : i32
    return %c0_i32, %c0_i32_0 : i32, i32
  }
  func.func @transform_3(%arg0: i32, %arg1: i32) -> (i32, i32) {
    %c0_i32 = arith.constant 0 : i32
    %c0_i32_0 = arith.constant 0 : i32
    %c0_i32_1 = arith.constant 0 : i32
    return %c0_i32, %c0_i32_0 : i32, i32
  }
  func.func @transform_4(%arg0: i32, %arg1: i32) -> (i32, i32, i32) {
    %c0_i32 = arith.constant 0 : i32
    %c0_i32_0 = arith.constant 0 : i32
    return %arg0, %c0_i32, %arg1 : i32, i32, i32
  }
  func.func @transform_5(%arg0: i32, %arg1: i32) -> (i32, i32) {
    %c0_i32 = arith.constant 0 : i32
    %c0_i32_0 = arith.constant 0 : i32
    %c0_i32_1 = arith.constant 0 : i32
    return %c0_i32, %c0_i32_0 : i32, i32
  }
  func.func @transform_6(%arg0: i32, %arg1: i32) -> (i32, i32) {
    %c0_i32 = arith.constant 0 : i32
    %c0_i32_0 = arith.constant 0 : i32
    %c0_i32_1 = arith.constant 0 : i32
    return %c0_i32, %c0_i32_0 : i32, i32
  }
}

</mosaic_0001>

<llo_original>
// kernel: tpu_custom_call.1
$region0: #{tpu_custom_call.1}
  #allocation0 [shape = 'u32[]', space=smem, size = 0x4, offset = 0x4, fixed_abs, tag = 'smem constant byte address 0x4 - core index']
  #allocation1 [shape = 'u32[144,128]{1,0:T(1,128)}', space=vmem, size = 0x12000, scoped, tag = 'internal scratch']
  %s0 = inlined_call_operand.vmem [shape: f32[2,4,256], index: 0, kind: input, shape index: {}]
  %s1 = inlined_call_operand.vmem [shape: f32[2,4,256], index: 1, kind: input, shape index: {}]
  %s2 = inlined_call_operand.vmem [shape: f32[16,4], index: 2, kind: input, shape index: {}]
  %s3 = inlined_call_operand.vmem [shape: f32[16,4], index: 3, kind: input, shape index: {}]
  %s4 = inlined_call_operand.hbm [shape: f32[2,16,256], index: 4, kind: output, shape index: {0}]
  %s5 = inlined_call_operand.vmem [shape: f32[16,1], index: 5, kind: output, shape index: {1}]
  %s6 = inlined_call_operand.vmem [shape: f32[16,1], index: 6, kind: output, shape index: {2}]
  %7 = xla_tuple %s4, %s5, %s6
  %s8 = sld [smem:[#allocation0]]
  $region69: #{tpu_custom_call.1} parent=0
    _
  %s10 = ssub.s32 1, %s8
  %s11 = scalar_select 0, %s10, %s8
  $region1: #{tpu_custom_call.1} parent=0
    #allocation2 [shape = 'u8[32768]{0}', space=vmem, size = 0x8000, scoped, tag = 'output window, operand 0']
    #allocation3 [shape = 's32[2]{0}', space=sflag, size = 0x8, scoped, tag = 'scoped memory for tpu_custom_call.1']
    %12 = vsyncpa [#allocation3], 0
    %s13 = scalar_lea.sflag [#allocation3], 1
    %14 = vsyncpa %s13, 0
    loop: start=0, step=1, limit=4
    $region2: #{tpu_custom_call.1} parent=1 // loop_pre_header
      _
    $region3: #{tpu_custom_call.1} parent=1 // loop_header
      %s16 = sphi 0, %s20
      %p17 = scmp.ge.s32.totalorder %s16, 4
      %s23 = sphi 0, %s35
      %s24 = sphi 0, %s31
      %s25 = sphi 0, %s23
      %s26 = sphi 0, %s24
      %s27 = sphi 0, %s25
      %s28 = sphi 0, %s26
      %s40 = sphi 0, %s42
      %s43 = sphi 0, %s40
      %s44 = sphi 0, %s43
      %s60 = sphi 0, %s44
      %s68 = sphi 0, %s70
      %s71 = sphi 0, %s68
      %s72 = sphi 0, %s71
      %s88 = sphi 0, %s72
      %s92 = sphi 0, %s92
      %s94 = sphi 0, %s92
      %s95 = sphi 0, %s94
      %s109 = sphi 0, %s95
      %s113 = sphi 0, %s113
      %s115 = sphi 0, %s113
      %s116 = sphi 0, %s115
      %s130 = sphi 0, %s116
      %s138 = sphi 0, %s140
      %s141 = sphi 0, %s138
      %s142 = sphi 0, %s141
      %s158 = sphi 0, %s142
      %s162 = sphi 0, %s162
      %s164 = sphi 0, %s162
      %s165 = sphi 0, %s164
      %s179 = sphi 0, %s165
      %s183 = sphi 0, %s183
      %s185 = sphi 0, %s183
      %s186 = sphi 0, %s185
      %s200 = sphi 0, %s186
    $region4: #{tpu_custom_call.1} parent=1 // loop_header_branch
      %19 = sbr.rel (%p17) target = $region8
    $region5: #{tpu_custom_call.1} parent=1 // loop_body
      %s21 = ssub.s32 %s16, 1
      %s22 = ssub.s32 %s16, 2
      %s29 = sadd.s32 1, %s24
      %p30 = scmp.ge.s32.totalorder %s29, 1
      %s31 = scalar_select %p30, 0, %s29
      %s32 = sadd.s32 1, %s23
      %s33 = scalar_select %p30, %s32, %s23
      %p34 = scmp.ge.s32.totalorder %s33, 2
      %s35 = scalar_select %p34, 0, %s33
      %s36 = ssub.s32 %s23, %s35
      %s37 = ssub.s32 %s24, %s31
      %s38 = sor.u32 %s36, %s37
      %p39 = scmp.eq.s32.totalorder %s38, 0
      %s41 = sadd.s32 %s40, 1
      %s42 = scalar_select %p39, %s40, %s41
      %p45 = pneg %p39
      %p46 = scmp.eq.s32.totalorder %s16, 1
      %p47 = por %p45, %p46
      %p48 = scmp.ne.s32.totalorder %s40, %s43
      %p49 = scmp.eq.s32.totalorder %s16, 0
      %p50 = por %p48, %p49
      %p51 = scmp.ne.s32.totalorder %s40, %s43
      %p52 = scmp.eq.s32.totalorder %s21, 1
      %p53 = por %p51, %p52
      %p54 = scmp.ne.s32.totalorder %s43, %s44
      %p55 = scmp.eq.s32.totalorder %s21, 0
      %p56 = por %p54, %p55
      %p57 = scmp.ne.s32.totalorder %s43, %s44
      %p58 = scmp.eq.s32.totalorder %s22, 1
      %p59 = por %p57, %p58
      %p61 = scmp.ne.s32.totalorder %s44, %s60
      %p62 = scmp.eq.s32.totalorder %s22, 0
      %p63 = por %p61, %p62
      %s64 = ssub.s32 %s23, %s35
      %s65 = ssub.s32 %s24, %s31
      %s66 = sor.u32 %s64, %s65
      %p67 = scmp.eq.s32.totalorder %s66, 0
      %s69 = sadd.s32 %s68, 1
      %s70 = scalar_select %p67, %s68, %s69
      %p73 = pneg %p67
      %p74 = scmp.eq.s32.totalorder %s16, 1
      %p75 = por %p73, %p74
      %p76 = scmp.ne.s32.totalorder %s68, %s71
      %p77 = scmp.eq.s32.totalorder %s16, 0
      %p78 = por %p76, %p77
      %p79 = scmp.ne.s32.totalorder %s68, %s71
      %p80 = scmp.eq.s32.totalorder %s21, 1
      %p81 = por %p79, %p80
      %p82 = scmp.ne.s32.totalorder %s71, %s72
      %p83 = scmp.eq.s32.totalorder %s21, 0
      %p84 = por %p82, %p83
      %p85 = scmp.ne.s32.totalorder %s71, %s72
      %p86 = scmp.eq.s32.totalorder %s22, 1
      %p87 = por %p85, %p86
      %p89 = scmp.ne.s32.totalorder %s72, %s88
      %p90 = scmp.eq.s32.totalorder %s22, 0
      %p91 = por %p89, %p90
      %s93 = sadd.s32 %s92, 1
      %p96 = scmp.eq.s32.totalorder %s16, 1
      %p97 = scmp.ne.s32.totalorder %s92, %s94
      %p98 = scmp.eq.s32.totalorder %s16, 0
      %p99 = por %p97, %p98
      %p100 = scmp.ne.s32.totalorder %s92, %s94
      %p101 = scmp.eq.s32.totalorder %s21, 1
      %p102 = por %p100, %p101
      %p103 = scmp.ne.s32.totalorder %s94, %s95
      %p104 = scmp.eq.s32.totalorder %s21, 0
      %p105 = por %p103, %p104
      %p106 = scmp.ne.s32.totalorder %s94, %s95
      %p107 = scmp.eq.s32.totalorder %s22, 1
      %p108 = por %p106, %p107
      %p110 = scmp.ne.s32.totalorder %s95, %s109
      %p111 = scmp.eq.s32.totalorder %s22, 0
      %p112 = por %p110, %p111
      %s114 = sadd.s32 %s113, 1
      %p117 = scmp.eq.s32.totalorder %s16, 1
      %p118 = scmp.ne.s32.totalorder %s113, %s115
      %p119 = scmp.eq.s32.totalorder %s16, 0
      %p120 = por %p118, %p119
      %p121 = scmp.ne.s32.totalorder %s113, %s115
      %p122 = scmp.eq.s32.totalorder %s21, 1
      %p123 = por %p121, %p122
      %p124 = scmp.ne.s32.totalorder %s115, %s116
      %p125 = scmp.eq.s32.totalorder %s21, 0
      %p126 = por %p124, %p125
      %p127 = scmp.ne.s32.totalorder %s115, %s116
      %p128 = scmp.eq.s32.totalorder %s22, 1
      %p129 = por %p127, %p128
      %p131 = scmp.ne.s32.totalorder %s116, %s130
      %p132 = scmp.eq.s32.totalorder %s22, 0
      %p133 = por %p131, %p132
      %s134 = ssub.s32 %s23, %s35
      %s135 = ssub.s32 %s24, %s31
      %s136 = sor.u32 %s134, %s135
      %p137 = scmp.eq.s32.totalorder %s136, 0
      %s139 = sadd.s32 %s138, 1
      %s140 = scalar_select %p137, %s138, %s139
      %p143 = pneg %p137
      %p144 = scmp.eq.s32.totalorder %s16, 1
      %p145 = por %p143, %p144
      %p146 = scmp.ne.s32.totalorder %s138, %s141
      %p147 = scmp.eq.s32.totalorder %s16, 0
      %p148 = por %p146, %p147
      %p149 = scmp.ne.s32.totalorder %s138, %s141
      %p150 = scmp.eq.s32.totalorder %s21, 1
      %p151 = por %p149, %p150
      %p152 = scmp.ne.s32.totalorder %s141, %s142
      %p153 = scmp.eq.s32.totalorder %s21, 0
      %p154 = por %p152, %p153
      %p155 = scmp.ne.s32.totalorder %s141, %s142
      %p156 = scmp.eq.s32.totalorder %s22, 1
      %p157 = por %p155, %p156
      %p159 = scmp.ne.s32.totalorder %s142, %s158
      %p160 = scmp.eq.s32.totalorder %s22, 0
      %p161 = por %p159, %p160
      %s163 = sadd.s32 %s162, 1
      %p166 = scmp.eq.s32.totalorder %s16, 1
      %p167 = scmp.ne.s32.totalorder %s162, %s164
      %p168 = scmp.eq.s32.totalorder %s16, 0
      %p169 = por %p167, %p168
      %p170 = scmp.ne.s32.totalorder %s162, %s164
      %p171 = scmp.eq.s32.totalorder %s21, 1
      %p172 = por %p170, %p171
      %p173 = scmp.ne.s32.totalorder %s164, %s165
      %p174 = scmp.eq.s32.totalorder %s21, 0
      %p175 = por %p173, %p174
      %p176 = scmp.ne.s32.totalorder %s164, %s165
      %p177 = scmp.eq.s32.totalorder %s22, 1
      %p178 = por %p176, %p177
      %p180 = scmp.ne.s32.totalorder %s165, %s179
      %p181 = scmp.eq.s32.totalorder %s22, 0
      %p182 = por %p180, %p181
      %s184 = sadd.s32 %s183, 1
      %p187 = scmp.eq.s32.totalorder %s16, 1
      %p188 = scmp.ne.s32.totalorder %s183, %s185
      %p189 = scmp.eq.s32.totalorder %s16, 0
      %p190 = por %p188, %p189
      %p191 = scmp.ne.s32.totalorder %s183, %s185
      %p192 = scmp.eq.s32.totalorder %s21, 1
      %p193 = por %p191, %p192
      %p194 = scmp.ne.s32.totalorder %s185, %s186
      %p195 = scmp.eq.s32.totalorder %s21, 0
      %p196 = por %p194, %p195
      %p197 = scmp.ne.s32.totalorder %s185, %s186
      %p198 = scmp.eq.s32.totalorder %s22, 1
      %p199 = por %p197, %p198
      %p201 = scmp.ne.s32.totalorder %s186, %s200
      %p202 = scmp.eq.s32.totalorder %s22, 0
      %p203 = por %p201, %p202
      %p204 = scmp.le.s32.totalorder 1, %s16
      %p205 = scmp.lt.s32.totalorder %s16, 3
      %p206 = pnand %p204, %p205
      %p207 = pneg %p206
      // Predicated region
      $region9: #{tpu_custom_call.1} parent=5 // pred_check
        _
      $region10: #{tpu_custom_call.1} parent=5 // pred_check_branch
        %209 = sbr.rel (%p206) target = $region12
      $region11: #{tpu_custom_call.1} parent=5 // pred_region
        %s210 = ssub.s32 %s16, 1
        // Predicated region
        $region13: #{tpu_custom_call.1} parent=11 // pred_check
          %p211 = pneg %p105
        $region14: #{tpu_custom_call.1} parent=11 // pred_check_branch
          %213 = sbr.rel (%p211) target = $region16
        $region15: #{tpu_custom_call.1} parent=11 // pred_region
          _
        $region16: #{tpu_custom_call.1} parent=11 // pred_fallthru
          _
        // Predicated region
        $region17: #{tpu_custom_call.1} parent=11 // pred_check
          %p214 = pneg %p126
        $region18: #{tpu_custom_call.1} parent=11 // pred_check_branch
          %216 = sbr.rel (%p214) target = $region20
        $region19: #{tpu_custom_call.1} parent=11 // pred_region
          _
        $region20: #{tpu_custom_call.1} parent=11 // pred_fallthru
          _
      $region12: #{tpu_custom_call.1} parent=5 // pred_fallthru
        _
      %p217 = scmp.lt.s32.totalorder %s16, 2
      // Predicated region
      $region21: #{tpu_custom_call.1} parent=5 // pred_check
        %p218 = pneg %p217
      $region22: #{tpu_custom_call.1} parent=5 // pred_check_branch
        %220 = sbr.rel (%p218) target = $region24
      $region23: #{tpu_custom_call.1} parent=5 // pred_region
        // Predicated region
        $region25: #{tpu_custom_call.1} parent=23 // pred_check
          %p221 = pneg %p50
        $region26: #{tpu_custom_call.1} parent=23 // pred_check_branch
          %223 = sbr.rel (%p221) target = $region28
        $region27: #{tpu_custom_call.1} parent=23 // pred_region
          %s224 = smul.u32 2, %s24
          %p225 = scmp.lt.s32.totalorder %s23, 1
          %s226 = scalar_select %p225, %s23, 1
          %p227 = scmp.lt.s32.totalorder %s224, 1
          %s228 = scalar_select %p227, %s224, 1
          %s229 = smul.addr %s226, 2
          %s230 = sadd.s32 %s228, %s229
          %s231 = smul.addr %s230, 4
          %s232 = scalar_lea.vmem %s0, %s231
          %s233 = smul.u32 2, %s24
        $region28: #{tpu_custom_call.1} parent=23 // pred_fallthru
          _
        // Predicated region
        $region29: #{tpu_custom_call.1} parent=23 // pred_check
          %p234 = pneg %p78
        $region30: #{tpu_custom_call.1} parent=23 // pred_check_branch
          %236 = sbr.rel (%p234) target = $region32
        $region31: #{tpu_custom_call.1} parent=23 // pred_region
          %s237 = smul.u32 2, %s24
          %p238 = scmp.lt.s32.totalorder %s23, 1
          %s239 = scalar_select %p238, %s23, 1
          %p240 = scmp.lt.s32.totalorder %s237, 1
          %s241 = scalar_select %p240, %s237, 1
          %s242 = smul.addr %s239, 2
          %s243 = sadd.s32 %s241, %s242
          %s244 = smul.addr %s243, 4
          %s245 = scalar_lea.vmem %s1, %s244
          %s246 = smul.u32 2, %s24
        $region32: #{tpu_custom_call.1} parent=23 // pred_fallthru
          _
      $region24: #{tpu_custom_call.1} parent=5 // pred_fallthru
        _
      %p247 = scmp.le.s32.totalorder 1, %s16
      %p248 = scmp.lt.s32.totalorder %s16, 3
      %p249 = pnand %p247, %p248
      %p250 = pneg %p249
      // Predicated region
      $region33: #{tpu_custom_call.1} parent=5 // pred_check
        _
      $region34: #{tpu_custom_call.1} parent=5 // pred_check_branch
        %252 = sbr.rel (%p249) target = $region36
      $region35: #{tpu_custom_call.1} parent=5 // pred_region
        %s253 = ssub.s32 %s16, 1
        %s254 = smul.u32 2, %s26
        %p255 = scmp.lt.s32.totalorder %s25, 1
        %s256 = scalar_select %p255, %s25, 1
        %p257 = scmp.lt.s32.totalorder %s254, 1
        %s258 = scalar_select %p257, %s254, 1
        %s259 = smul.addr %s256, 2
        %s260 = sadd.s32 %s258, %s259
        %s261 = smul.addr %s260, 4
        %s262 = scalar_lea.vmem %s0, %s261
        %p263 = pneg %p56
        %p264 = pneg %p53
        %s265 = smul.u32 2, %s26
        %p266 = scmp.lt.s32.totalorder %s25, 1
        %s267 = scalar_select %p266, %s25, 1
        %p268 = scmp.lt.s32.totalorder %s265, 1
        %s269 = scalar_select %p268, %s265, 1
        %s270 = smul.addr %s267, 2
        %s271 = sadd.s32 %s269, %s270
        %s272 = smul.addr %s271, 4
        %s273 = scalar_lea.vmem %s1, %s272
        %p274 = pneg %p84
        %p275 = pneg %p81
        %p276 = pneg %p105
        %p277 = pneg %p102
        %p278 = pneg %p126
        %p279 = pneg %p123
        %p280 = pneg %p154
        %p281 = pneg %p151
        %s282 = sand.u32 %s141, 1
        %s283 = scalar_lea.sflag [#allocation3], %s282
        %s284 = sand.u32 %s141, 1
        %s285 = smul.addr %s284, 32
        %s286 = scalar_lea.vmem [#allocation2], %s285
        %p287 = pneg %p175
        %p288 = pneg %p172
        %p289 = pneg %p196
        %p290 = pneg %p193
        %s291 = smul.u32 2, %s26
        %p292 = scmp.lt.s32.totalorder %s25, 1
        %s293 = scalar_select %p292, %s25, 1
        %p294 = scmp.lt.s32.totalorder %s291, 1
        %s295 = scalar_select %p294, %s291, 1
        %s296 = smul.addr %s293, 2
        %s297 = sadd.s32 %s295, %s296
        %s298 = smul.addr %s297, 4
        %s299 = scalar_lea.vmem %s0, %s298
        %s300 = smul.u32 2, %s26
        %s301 = smul.u32 2, %s26
        %p302 = scmp.lt.s32.totalorder %s25, 1
        %s303 = scalar_select %p302, %s25, 1
        %p304 = scmp.lt.s32.totalorder %s301, 1
        %s305 = scalar_select %p304, %s301, 1
        %s306 = smul.addr %s303, 2
        %s307 = sadd.s32 %s305, %s306
        %s308 = smul.addr %s307, 4
        %s309 = scalar_lea.vmem %s1, %s308
        %s310 = smul.u32 2, %s26
        %s311 = smul.u32 2, %s26
        %v312 = vld [vmem:[%s2] sm:$0xff]
        %v313 = vld [vmem:[%s2 + $0x8] sm:$0xff]
        %v314 = vld [vmem:[%s299] sm:$0xff]
        %v315 = vld [vmem:[%s3] sm:$0xff]
        %v316 = vld [vmem:[%s3 + $0x8] sm:$0xff]
        %v317 = vld [vmem:[%s309] sm:$0xff]
        %v319 = vcombine.high %v317, %v317
        %vm320 = vcmask 31744
        %v322 = vsel %vm320, %v315, 0
        %v325 = vsel %vm320, %v316, 0
        %vm327 = vcmask 1043456
        %v328 = vsel %vm327, %v317, 0
        %v330 = vsel %vm327, %v319, 0
        %332 = vmatprep.subr.mxu0 %v330
        %333 = vmatpush1.msra.mxu0 %v328
        %334 = vmatprep.subr.mxu0 0.0
        %335 = vmatpush1.msra.mxu0 0.0
        %336 = vmatprep.subr.mxu0 0.0
        %337 = vmatpush1.msra.mxu0 0.0
        %338 = vmatprep.subr.mxu0 0.0
        %339 = vmatpush1.msra.mxu0 0.0
        %340 = vmatprep.subr.mxu0 0.0
        %341 = vmatpush1.msra.mxu0 0.0
        %342 = vmatprep.subr.mxu0 0.0
        %343 = vmatpush1.msra.mxu0 0.0
        %344 = vmatprep.subr.mxu0 0.0
        %345 = vmatpush1.msra.mxu0 0.0
        %346 = vmatprep.subr.mxu0 0.0
        %347 = vmatpush1.msra.mxu0 0.0
        %348 = vmatprep.subr.mxu0 0.0
        %349 = vmatpush1.msra.mxu0 0.0
        %350 = vmatprep.subr.mxu0 0.0
        %351 = vmatpush1.msra.mxu0 0.0
        %352 = vmatprep.subr.mxu0 0.0
        %353 = vmatpush1.msra.mxu0 0.0
        %354 = vmatprep.subr.mxu0 0.0
        %355 = vmatpush1.msra.mxu0 0.0
        %356 = vmatprep.subr.mxu0 0.0
        %357 = vmatpush1.msra.mxu0 0.0
        %358 = vmatprep.subr.mxu0 0.0
        %359 = vmatpush1.msra.mxu0 0.0
        %360 = vmatprep.subr.mxu0 0.0
        %361 = vmatpush1.msra.mxu0 0.0
        %362 = vmatprep.subr.mxu0 0.0
        %363 = vmatpush1.msra.mxu0 0.0
        %364 = vmatprep.subr.mxu0 0.0
        %365 = vmatpush1.msra.mxu0 0.0
        %366 = vmatprep.subr.mxu0 0.0
        %367 = vmatpush1.msra.mxu0 0.0
        %368 = vmatprep.subr.mxu0 0.0
        %369 = vmatpush1.msra.mxu0 0.0
        %370 = vmatprep.subr.mxu0 0.0
        %371 = vmatpush1.msra.mxu0 0.0
        %372 = vmatprep.subr.mxu0 0.0
        %373 = vmatpush1.msra.mxu0 0.0
        %374 = vmatprep.subr.mxu0 0.0
        %375 = vmatpush1.msra.mxu0 0.0
        %376 = vmatprep.subr.mxu0 0.0
        %377 = vmatpush1.msra.mxu0 0.0
        %378 = vmatprep.subr.mxu0 0.0
        %379 = vmatpush1.msra.mxu0 0.0
        %380 = vmatprep.subr.mxu0 0.0
        %381 = vmatpush1.msra.mxu0 0.0
        %382 = vmatprep.subr.mxu0 0.0
        %383 = vmatpush1.msra.mxu0 0.0
        %384 = vmatprep.subr.mxu0 0.0
        %385 = vmatpush1.msra.mxu0 0.0
        %386 = vmatprep.subr.mxu0 0.0
        %387 = vmatpush1.msra.mxu0 0.0
        %388 = vmatprep.subr.mxu0 0.0
        %389 = vmatpush1.msra.mxu0 0.0
        %390 = vmatprep.subr.mxu0 0.0
        %391 = vmatpush1.msra.mxu0 0.0
        %392 = vmatprep.subr.mxu0 0.0
        %393 = vmatpush1.msra.mxu0 0.0
        %394 = vmatprep.subr.mxu0 0.0
        %395 = vmatpush1.msra.mxu0 0.0
        %396 = vmatprep.mubr.f32.mxu0 0.0
        %397 = vmatmul.mubr.f32.gmra.mrb[0].mxu0 %v322
        %v398 = vpop.f32.mrb[0].mxu0
        %v399 = vadd.f32 0.0, %v398
        %v400 = vpop.f32.mrb[0].mxu0
        %v401 = vadd.f32 0.0, %v400
        %402 = vmatprep.mubr.f32.mxu0 0.0
        %403 = vmatmul.mubr.f32.gmra.mrb[0].mxu0 %v325
        %v404 = vpop.f32.mrb[0].mxu0
        %v405 = vadd.f32 0.0, %v404
        %v406 = vpop.f32.mrb[0].mxu0
        %v407 = vadd.f32 0.0, %v406
        %408 = vdwg.mxu0
        %v410 = vcombine.high %v314, %v314
        %v412 = vsel %vm320, %v312, 0
        %v415 = vsel %vm320, %v313, 0
        %v417 = vsel %vm327, %v314, 0
        %v419 = vsel %vm327, %v410, 0
        %421 = vmatprep.subr.mxu0 %v419
        %422 = vmatpush1.msra.mxu0 %v417
        %423 = vmatprep.subr.mxu0 0.0
        %424 = vmatpush1.msra.mxu0 0.0
        %425 = vmatprep.subr.mxu0 0.0
        %426 = vmatpush1.msra.mxu0 0.0
        %427 = vmatprep.subr.mxu0 0.0
        %428 = vmatpush1.msra.mxu0 0.0
        %429 = vmatprep.subr.mxu0 0.0
        %430 = vmatpush1.msra.mxu0 0.0
        %431 = vmatprep.subr.mxu0 0.0
        %432 = vmatpush1.msra.mxu0 0.0
        %433 = vmatprep.subr.mxu0 0.0
        %434 = vmatpush1.msra.mxu0 0.0
        %435 = vmatprep.subr.mxu0 0.0
        %436 = vmatpush1.msra.mxu0 0.0
        %437 = vmatprep.subr.mxu0 0.0
        %438 = vmatpush1.msra.mxu0 0.0
        %439 = vmatprep.subr.mxu0 0.0
        %440 = vmatpush1.msra.mxu0 0.0
        %441 = vmatprep.subr.mxu0 0.0
        %442 = vmatpush1.msra.mxu0 0.0
        %443 = vmatprep.subr.mxu0 0.0
        %444 = vmatpush1.msra.mxu0 0.0
        %445 = vmatprep.subr.mxu0 0.0
        %446 = vmatpush1.msra.mxu0 0.0
        %447 = vmatprep.subr.mxu0 0.0
        %448 = vmatpush1.msra.mxu0 0.0
        %449 = vmatprep.subr.mxu0 0.0
        %450 = vmatpush1.msra.mxu0 0.0
        %451 = vmatprep.subr.mxu0 0.0
        %452 = vmatpush1.msra.mxu0 0.0
        %453 = vmatprep.subr.mxu0 0.0
        %454 = vmatpush1.msra.mxu0 0.0
        %455 = vmatprep.subr.mxu0 0.0
        %456 = vmatpush1.msra.mxu0 0.0
        %457 = vmatprep.subr.mxu0 0.0
        %458 = vmatpush1.msra.mxu0 0.0
        %459 = vmatprep.subr.mxu0 0.0
        %460 = vmatpush1.msra.mxu0 0.0
        %461 = vmatprep.subr.mxu0 0.0
        %462 = vmatpush1.msra.mxu0 0.0
        %463 = vmatprep.subr.mxu0 0.0
        %464 = vmatpush1.msra.mxu0 0.0
        %465 = vmatprep.subr.mxu0 0.0
        %466 = vmatpush1.msra.mxu0 0.0
        %467 = vmatprep.subr.mxu0 0.0
        %468 = vmatpush1.msra.mxu0 0.0
        %469 = vmatprep.subr.mxu0 0.0
        %470 = vmatpush1.msra.mxu0 0.0
        %471 = vmatprep.subr.mxu0 0.0
        %472 = vmatpush1.msra.mxu0 0.0
        %473 = vmatprep.subr.mxu0 0.0
        %474 = vmatpush1.msra.mxu0 0.0
        %475 = vmatprep.subr.mxu0 0.0
        %476 = vmatpush1.msra.mxu0 0.0
        %477 = vmatprep.subr.mxu0 0.0
        %478 = vmatpush1.msra.mxu0 0.0
        %479 = vmatprep.subr.mxu0 0.0
        %480 = vmatpush1.msra.mxu0 0.0
        %481 = vmatprep.subr.mxu0 0.0
        %482 = vmatpush1.msra.mxu0 0.0
        %483 = vmatprep.subr.mxu0 0.0
        %484 = vmatpush1.msra.mxu0 0.0
        %485 = vmatprep.mubr.f32.mxu0 0.0
        %486 = vmatmul.mubr.f32.gmra.mrb[0].mxu0 %v412
        %v487 = vpop.f32.mrb[0].mxu0
        %v488 = vadd.f32 %v399, %v487
        %v489 = vpop.f32.mrb[0].mxu0
        %v490 = vadd.f32 %v401, %v489
        %491 = vmatprep.mubr.f32.mxu0 0.0
        %492 = vmatmul.mubr.f32.gmra.mrb[0].mxu0 %v415
        %v493 = vpop.f32.mrb[0].mxu0
        %v494 = vadd.f32 %v405, %v493
        %v495 = vpop.f32.mrb[0].mxu0
        %v496 = vadd.f32 %v407, %v495
        %497 = vdwg.mxu0
        %498 = vst [vmem:[%s286] sm:$0xff] %v488
        %499 = vst [vmem:[%s286 + $0x8] sm:$0xff] %v490
        %500 = vst [vmem:[%s286 + $0x10] sm:$0xff] %v494
        %501 = vst [vmem:[%s286 + $0x18] sm:$0xff] %v496
        %p502 = scmp.eq.s32.totalorder %s25, 0
        %p503 = scmp.eq.s32.totalorder %s26, 0
        %p504 = pnand %p502, %p503
        %p505 = pneg %p504
        // Predicated region
        $region37: #{tpu_custom_call.1} parent=35 // pred_check
          _
        $region38: #{tpu_custom_call.1} parent=35 // pred_check_branch
          %507 = sbr.rel (%p504) target = $region40
        $region39: #{tpu_custom_call.1} parent=35 // pred_region
          %vm508 = vcmask 7168
          %509 = vst.msk [vmem:[%s5] sm:$0xff] %vm508, 0.0
          %510 = vst.msk [vmem:[%s5 + $0x8] sm:$0xff] %vm508, 0.0
          %511 = vst.msk [vmem:[%s6] sm:$0xff] %vm508, 0.0
          %512 = vst.msk [vmem:[%s6 + $0x8] sm:$0xff] %vm508, 0.0
        $region40: #{tpu_custom_call.1} parent=35 // pred_fallthru
          _
        %v513 = vld [vmem:[%s5] sm:$0xff]
        %v514 = vld [vmem:[%s5 + $0x8] sm:$0xff]
        %v515 = vadd.f32 %v488, %v490
        %516 = vadd.xlane.f32.xlu0 %v515
        %v517 = vpop.xlane.xlu0 %516
        %v518 = vadd.f32 %v494, %v496
        %519 = vadd.xlane.f32.xlu0 %v518
        %v520 = vpop.xlane.xlu0 %519
        %v521 = vadd.f32 %v513, %v517
        %v522 = vadd.f32 %v514, %v520
        %vm523 = vcmask 7168
        %524 = vst.msk [vmem:[%s5] sm:$0xff] %vm523, %v521
        %525 = vst.msk [vmem:[%s5 + $0x8] sm:$0xff] %vm523, %v522
        %v526 = vld [vmem:[%s6] sm:$0xff]
        %v527 = vld [vmem:[%s6 + $0x8] sm:$0xff]
        %v528 = vmul.f32 %v488, %v488
        %v529 = vmul.f32 %v490, %v490
        %v530 = vmul.f32 %v494, %v494
        %v531 = vmul.f32 %v496, %v496
        %v532 = vadd.f32 %v528, %v529
        %533 = vadd.xlane.f32.xlu0 %v532
        %v534 = vpop.xlane.xlu0 %533
        %v535 = vadd.f32 %v530, %v531
        %536 = vadd.xlane.f32.xlu0 %v535
        %v537 = vpop.xlane.xlu0 %536
        %v538 = vadd.f32 %v526, %v534
        %v539 = vadd.f32 %v527, %v537
        %540 = vst.msk [vmem:[%s6] sm:$0xff] %vm523, %v538
        %541 = vst.msk [vmem:[%s6 + $0x8] sm:$0xff] %vm523, %v539
        %s542 = sand.u32 %s141, 1
        %s543 = scalar_lea.sflag [#allocation3], %s542
        %s544 = sand.u32 %s141, 1
        %s545 = smul.addr %s544, 32
        %s546 = scalar_lea.vmem [#allocation2], %s545
        // Predicated region
        $region41: #{tpu_custom_call.1} parent=35 // pred_check
          %p547 = pneg %p151
        $region42: #{tpu_custom_call.1} parent=35 // pred_check_branch
          %549 = sbr.rel (%p547) target = $region44
        $region43: #{tpu_custom_call.1} parent=35 // pred_region
          %s550 = smul.u32 2, %s26
          %s552 = ssub.s32 512, 512
          %553 = vsyncadd %s543, %s552
          %s554 = smul.addr %s25, 4
          %s555 = sadd.s32 %s550, %s554
          %s556 = smul.addr %s555, 128
          %s557 = scalar_lea.hbm %s4, %s556
          %s558 = sshll.u32 %s546, 4
          %s559 = int_to_ptr.vmem [resolvable:$true] %s558
          %564 = dma.vmem_to_hbm [thread:$0]  %s559, 512, %s557, %s543, 256, 256, 16
        $region44: #{tpu_custom_call.1} parent=35 // pred_fallthru
          _
        // Predicated region
        $region45: #{tpu_custom_call.1} parent=35 // pred_check
          %p565 = pneg %p172
        $region46: #{tpu_custom_call.1} parent=35 // pred_check_branch
          %567 = sbr.rel (%p565) target = $region48
        $region47: #{tpu_custom_call.1} parent=35 // pred_region
          _
        $region48: #{tpu_custom_call.1} parent=35 // pred_fallthru
          _
        // Predicated region
        $region49: #{tpu_custom_call.1} parent=35 // pred_check
          %p568 = pneg %p193
        $region50: #{tpu_custom_call.1} parent=35 // pred_check_branch
          %570 = sbr.rel (%p568) target = $region52
        $region51: #{tpu_custom_call.1} parent=35 // pred_region
          _
        $region52: #{tpu_custom_call.1} parent=35 // pred_fallthru
          _
        // Predicated region
        $region53: #{tpu_custom_call.1} parent=35 // pred_check
          %p571 = pneg %p172
        $region54: #{tpu_custom_call.1} parent=35 // pred_check_branch
          %573 = sbr.rel (%p571) target = $region56
        $region55: #{tpu_custom_call.1} parent=35 // pred_region
          _
        $region56: #{tpu_custom_call.1} parent=35 // pred_fallthru
          _
        // Predicated region
        $region57: #{tpu_custom_call.1} parent=35 // pred_check
          %p574 = pneg %p193
        $region58: #{tpu_custom_call.1} parent=35 // pred_check_branch
          %576 = sbr.rel (%p574) target = $region60
        $region59: #{tpu_custom_call.1} parent=35 // pred_region
          _
        $region60: #{tpu_custom_call.1} parent=35 // pred_fallthru
          _
      $region36: #{tpu_custom_call.1} parent=5 // pred_fallthru
        _
      %p577 = scmp.le.s32.totalorder 2, %s16
      // Predicated region
      $region61: #{tpu_custom_call.1} parent=5 // pred_check
        %p578 = pneg %p577
      $region62: #{tpu_custom_call.1} parent=5 // pred_check_branch
        %580 = sbr.rel (%p578) target = $region64
      $region63: #{tpu_custom_call.1} parent=5 // pred_region
        %s581 = ssub.s32 %s16, 2
        // Predicated region
        $region65: #{tpu_custom_call.1} parent=63 // pred_check
          %p582 = pneg %p157
        $region66: #{tpu_custom_call.1} parent=63 // pred_check_branch
          %584 = sbr.rel (%p582) target = $region68
        $region67: #{tpu_custom_call.1} parent=63 // pred_region
          %s585 = sand.u32 %s142, 1
          %s586 = scalar_lea.sflag [#allocation3], %s585
          %s587 = sand.u32 %s142, 1
          %s588 = smul.addr %s587, 32
          %s589 = scalar_lea.vmem [#allocation2], %s588
          %590 = dma.done %s586, 512
        $region68: #{tpu_custom_call.1} parent=63 // pred_fallthru
          _
      $region64: #{tpu_custom_call.1} parent=5 // pred_fallthru
        _
    $region6: #{tpu_custom_call.1} parent=1 // loop_footer
      %s20 = sadd.s32 1, %s16
    $region7: #{tpu_custom_call.1} parent=1 // loop_footer_branch
      %15 = sbr.rel target = $region3
    $region8: #{tpu_custom_call.1} parent=1 // loop_exit
      _
    %591 = vsyncpa [#allocation3], 1
    %s592 = scalar_lea.sflag [#allocation3], 1
    %593 = vsyncpa %s592, 1

</llo_original>
